<compile_context>
chip_gen: v5e
topology: v5e:2x2
jax: 0.10.0
libtpu: 0.0.40
codegen_flags: <defaults>
</compile_context>

<pallas_src>
import jax
import jax.numpy as jnp
from jax.experimental import pallas as pl
from jax.experimental.pallas import tpu as pltpu


def _round_up(v: int, m: int) -> int:
    return ((v + m - 1) // m) * m


def make_mlp_kernel(num_layers: int, sigmoid_output: bool, compute_dtype):
    """Fused kernel computing the full MLP chain on one TM-row tile in VMEM."""

    def kernel(*refs):
        x_ref = refs[0]
        o_ref = refs[-1]
        param_refs = refs[1:-1]  # (w0, b0, w1, b1, ...)

        h = x_ref[...]
        if h.dtype != compute_dtype:
            h = h.astype(compute_dtype)

        acc = None
        for i in range(num_layers):
            w = param_refs[2 * i][...]                           # (in, out), native dtype -> MXU
            b = param_refs[2 * i + 1][...].astype(jnp.float32)   # (1, out)
            acc = jnp.dot(h, w, preferred_element_type=jnp.float32) + b
            if i < num_layers - 1:
                acc = jnp.maximum(acc, 0.0)          # ReLU on the f32 accumulator (VPU)
                h = acc.astype(compute_dtype)        # back to MXU-native dtype for next dot

        if sigmoid_output:
            acc = jax.nn.sigmoid(acc)                # f32 on EUP

        o_ref[...] = acc.astype(o_ref.dtype)

    return kernel


def mlp_pallas(x, weights, biases, *, sigmoid_output: bool = False, tm: int = 512):
    """x: [B, N, input_dim]. weights[i]: (out_i, in_i) PyTorch layout. biases[i]: (out_i,)."""
    num_layers = len(weights)
    B, N, in_dim = x.shape
    out_dim = weights[-1].shape[0]
    rows = B * N

    compute_dtype = x.dtype
    sub = 16 if compute_dtype == jnp.bfloat16 else 8

    # Row-tile size: sublane-aligned, never larger than (padded) row count.
    if rows <= tm:
        tm_eff = _round_up(max(rows, 1), sub)
    else:
        tm_eff = _round_up(tm, sub)
    rows_padded = _round_up(rows, tm_eff)
    grid = (pl.cdiv(rows_padded, tm_eff),)

    x2d = x.reshape(rows, in_dim)
    if rows_padded != rows:
        x2d = jnp.pad(x2d, ((0, rows_padded - rows), (0, 0)))

    # Glue: transpose weights to (in, out), lift biases to (1, out); match MXU dtype.
    w_list, b_list = [], []
    for w, b in zip(weights, biases):
        w_list.append(jnp.transpose(w).astype(compute_dtype))   # (in, out)
        b_list.append(b.reshape(1, -1).astype(jnp.float32))     # (1, out)

    # BlockSpecs: x/out tiled over rows; weights/biases constant index -> DMA'd once, resident.
    in_specs = [pl.BlockSpec((tm_eff, in_dim), lambda i: (i, 0))]
    params = []
    for w2, b2 in zip(w_list, b_list):
        in_specs.append(pl.BlockSpec(w2.shape, lambda i: (0, 0)))
        in_specs.append(pl.BlockSpec(b2.shape, lambda i: (0, 0)))
        params.append(w2)
        params.append(b2)
    out_spec = pl.BlockSpec((tm_eff, out_dim), lambda i: (i, 0))

    kernel = make_mlp_kernel(num_layers, sigmoid_output, compute_dtype)

    out2d = pl.pallas_call(
        kernel,
        out_shape=jax.ShapeDtypeStruct((rows_padded, out_dim), x.dtype),
        grid=grid,
        in_specs=in_specs,
        out_specs=out_spec,
        compiler_params=pltpu.CompilerParams(
            dimension_semantics=("parallel",),   # rows are independent -> v7x dual-TC sharding
        ),
    )(x2d, *params)

    return out2d[:rows].reshape(B, N, out_dim)


def mlp_reference(x, weights, biases, *, sigmoid_output: bool = False):
    num_layers = len(weights)
    h = x.astype(jnp.float32)
    for i, (w, b) in enumerate(zip(weights, biases)):
        h = h @ jnp.transpose(w).astype(jnp.float32) + b.astype(jnp.float32)
        if i < num_layers - 1:
            h = jnp.maximum(h, 0.0)
    if sigmoid_output:
        h = jax.nn.sigmoid(h)
    return h.astype(x.dtype)


if __name__ == "__main__":
    # Module config (small, consistent with the SAM MLP head):
    input_dim, hidden_dim, output_dim, num_layers = 32, 32, 16, 3
    B, N = 2, 8  # batch, tokens

    key = jax.random.PRNGKey(0)
    kx, *kps = jax.random.split(key, 1 + 2 * num_layers)

    x = jax.random.normal(kx, (B, N, input_dim), dtype=jnp.float32)

    # Deterministic synthetic parameters (PyTorch nn.Linear shapes: W=(out,in), b=(out,)).
    dims_in = [input_dim] + [hidden_dim] * (num_layers - 1)
    dims_out = [hidden_dim] * (num_layers - 1) + [output_dim]
    weights, biases = [], []
    for i, (din, dout) in enumerate(zip(dims_in, dims_out)):
        weights.append(0.1 * jax.random.normal(kps[2 * i], (dout, din), dtype=jnp.float32))
        biases.append(0.05 * jax.random.normal(kps[2 * i + 1], (dout,), dtype=jnp.float32))

    # Test 1: default tile (single-tile grid, no sigmoid).
    out = mlp_pallas(x, weights, biases, sigmoid_output=False)
    out = jax.block_until_ready(out)
    ref = mlp_reference(x, weights, biases, sigmoid_output=False)
    assert out.shape == (B, N, output_dim)
    assert jnp.allclose(out, ref, atol=1e-4, rtol=1e-4), "mismatch vs pure-JAX reference (test 1)"

    # Test 2: force a multi-tile grid with row padding + sigmoid (exercises the
    # pipelined path, resident weights, and the padded-row slice-off).
    B2, N2 = 2, 9  # rows=18, tm=8 -> padded to 24, grid=(3,)
    kx2 = jax.random.fold_in(kx, 1)
    x2 = jax.random.normal(kx2, (B2, N2, input_dim), dtype=jnp.float32)
    out2 = mlp_pallas(x2, weights, biases, sigmoid_output=True, tm=8)
    out2 = jax.block_until_ready(out2)
    ref2 = mlp_reference(x2, weights, biases, sigmoid_output=True)
    assert out2.shape == (B2, N2, output_dim)
    assert jnp.allclose(out2, ref2, atol=1e-4, rtol=1e-4), "mismatch vs pure-JAX reference (test 2)"

    print("KERNEL_OK")
</pallas_src>

<mosaic_0001>
module attributes {stable_mosaic.version = 11 : i64} {
  func.func @kernel(%arg0: i32, %arg1: memref<16x32xf32, #tpu.memory_space<vmem>>, %arg2: memref<32x32xf32, #tpu.memory_space<vmem>>, %arg3: memref<1x32xf32, #tpu.memory_space<vmem>>, %arg4: memref<32x32xf32, #tpu.memory_space<vmem>>, %arg5: memref<1x32xf32, #tpu.memory_space<vmem>>, %arg6: memref<32x16xf32, #tpu.memory_space<vmem>>, %arg7: memref<1x16xf32, #tpu.memory_space<vmem>>, %arg8: memref<16x16xf32, #tpu.memory_space<vmem>>) attributes {dimension_semantics = [#tpu.dimension_semantics<parallel>], iteration_bounds = array<i64: 1>, scalar_prefetch = 0 : i64, scratch_operands = 0 : i64, tpu.core_type = #tpu.core_type<tc>, window_params = [{transform_indices = @transform_0, window_bounds = array<i64: 16, 32>}, {pipeline_mode = #tpu.pipeline_mode<synchronous>, transform_indices = @transform_1, window_bounds = array<i64: 32, 32>}, {pipeline_mode = #tpu.pipeline_mode<synchronous>, transform_indices = @transform_2, window_bounds = array<i64: 1, 32>}, {pipeline_mode = #tpu.pipeline_mode<synchronous>, transform_indices = @transform_3, window_bounds = array<i64: 32, 32>}, {pipeline_mode = #tpu.pipeline_mode<synchronous>, transform_indices = @transform_4, window_bounds = array<i64: 1, 32>}, {pipeline_mode = #tpu.pipeline_mode<synchronous>, transform_indices = @transform_5, window_bounds = array<i64: 32, 16>}, {pipeline_mode = #tpu.pipeline_mode<synchronous>, transform_indices = @transform_6, window_bounds = array<i64: 1, 16>}, {transform_indices = @transform_7, window_bounds = array<i64: 16, 16>}]} {
    %c0 = arith.constant 0 : index
    %c0_0 = arith.constant 0 : index
    %0 = vector.load %arg1[%c0, %c0_0] : memref<16x32xf32, #tpu.memory_space<vmem>>, vector<16x32xf32>
    %c0_1 = arith.constant 0 : index
    %c0_2 = arith.constant 0 : index
    %1 = vector.load %arg2[%c0_1, %c0_2] : memref<32x32xf32, #tpu.memory_space<vmem>>, vector<32x32xf32>
    %c0_3 = arith.constant 0 : index
    %c0_4 = arith.constant 0 : index
    %2 = vector.load %arg3[%c0_3, %c0_4] : memref<1x32xf32, #tpu.memory_space<vmem>>, vector<1x32xf32>
    %cst = arith.constant dense<0.000000e+00> : vector<16x32xf32>
    %3 = tpu.matmul %0, %1, %cst {dimension_numbers = #tpu.dot_dimension_numbers<[1], [0], [0], [1], [0, 0, 1, 1], [], []>} : vector<16x32xf32>, vector<32x32xf32>, vector<16x32xf32> -> vector<16x32xf32>
    %4 = vector.broadcast %2 : vector<1x32xf32> to vector<16x32xf32>
    %5 = arith.addf %3, %4 : vector<16x32xf32>
    %cst_5 = arith.constant 0.000000e+00 : f32
    %6 = vector.broadcast %cst_5 : f32 to vector<16x32xf32>
    %7 = arith.maximumf %5, %6 : vector<16x32xf32>
    %c0_6 = arith.constant 0 : index
    %c0_7 = arith.constant 0 : index
    %8 = vector.load %arg4[%c0_6, %c0_7] : memref<32x32xf32, #tpu.memory_space<vmem>>, vector<32x32xf32>
    %c0_8 = arith.constant 0 : index
    %c0_9 = arith.constant 0 : index
    %9 = vector.load %arg5[%c0_8, %c0_9] : memref<1x32xf32, #tpu.memory_space<vmem>>, vector<1x32xf32>
    %cst_10 = arith.constant dense<0.000000e+00> : vector<16x32xf32>
    %10 = tpu.matmul %7, %8, %cst_10 {dimension_numbers = #tpu.dot_dimension_numbers<[1], [0], [0], [1], [0, 0, 1, 1], [], []>} : vector<16x32xf32>, vector<32x32xf32>, vector<16x32xf32> -> vector<16x32xf32>
    %11 = vector.broadcast %9 : vector<1x32xf32> to vector<16x32xf32>
    %12 = arith.addf %10, %11 : vector<16x32xf32>
    %cst_11 = arith.constant 0.000000e+00 : f32
    %13 = vector.broadcast %cst_11 : f32 to vector<16x32xf32>
    %14 = arith.maximumf %12, %13 : vector<16x32xf32>
    %c0_12 = arith.constant 0 : index
    %c0_13 = arith.constant 0 : index
    %15 = vector.load %arg6[%c0_12, %c0_13] : memref<32x16xf32, #tpu.memory_space<vmem>>, vector<32x16xf32>
    %c0_14 = arith.constant 0 : index
    %c0_15 = arith.constant 0 : index
    %16 = vector.load %arg7[%c0_14, %c0_15] : memref<1x16xf32, #tpu.memory_space<vmem>>, vector<1x16xf32>
    %cst_16 = arith.constant dense<0.000000e+00> : vector<16x16xf32>
    %17 = tpu.matmul %14, %15, %cst_16 {dimension_numbers = #tpu.dot_dimension_numbers<[1], [0], [0], [1], [0, 0, 1, 1], [], []>} : vector<16x32xf32>, vector<32x16xf32>, vector<16x16xf32> -> vector<16x16xf32>
    %18 = vector.broadcast %16 : vector<1x16xf32> to vector<16x16xf32>
    %19 = arith.addf %17, %18 : vector<16x16xf32>
    %c0_17 = arith.constant 0 : index
    %c0_18 = arith.constant 0 : index
    %20 = vector.load %arg8[%c0_17, %c0_18] : memref<16x16xf32, #tpu.memory_space<vmem>>, vector<16x16xf32>
    tpu.vector_store %arg8[%c0_17, %c0_18], %19 {strides = array<i32>} : memref<16x16xf32, #tpu.memory_space<vmem>>, vector<16x16xf32>,
    return
  }
  func.func @transform_0(%arg0: i32) -> (i32, i32) {
    %c0_i32 = arith.constant 0 : i32
    %c0_i32_0 = arith.constant 0 : i32
    return %arg0, %c0_i32 : i32, i32
  }
  func.func @transform_1(%arg0: i32) -> (i32, i32) {
    %c0_i32 = arith.constant 0 : i32
    %c0_i32_0 = arith.constant 0 : i32
    %c0_i32_1 = arith.constant 0 : i32
    return %c0_i32, %c0_i32_0 : i32, i32
  }
  func.func @transform_2(%arg0: i32) -> (i32, i32) {
    %c0_i32 = arith.constant 0 : i32
    %c0_i32_0 = arith.constant 0 : i32
    %c0_i32_1 = arith.constant 0 : i32
    return %c0_i32, %c0_i32_0 : i32, i32
  }
  func.func @transform_3(%arg0: i32) -> (i32, i32) {
    %c0_i32 = arith.constant 0 : i32
    %c0_i32_0 = arith.constant 0 : i32
    %c0_i32_1 = arith.constant 0 : i32
    return %c0_i32, %c0_i32_0 : i32, i32
  }
  func.func @transform_4(%arg0: i32) -> (i32, i32) {
    %c0_i32 = arith.constant 0 : i32
    %c0_i32_0 = arith.constant 0 : i32
    %c0_i32_1 = arith.constant 0 : i32
    return %c0_i32, %c0_i32_0 : i32, i32
  }
  func.func @transform_5(%arg0: i32) -> (i32, i32) {
    %c0_i32 = arith.constant 0 : i32
    %c0_i32_0 = arith.constant 0 : i32
    %c0_i32_1 = arith.constant 0 : i32
    return %c0_i32, %c0_i32_0 : i32, i32
  }
  func.func @transform_6(%arg0: i32) -> (i32, i32) {
    %c0_i32 = arith.constant 0 : i32
    %c0_i32_0 = arith.constant 0 : i32
    %c0_i32_1 = arith.constant 0 : i32
    return %c0_i32, %c0_i32_0 : i32, i32
  }
  func.func @transform_7(%arg0: i32) -> (i32, i32) {
    %c0_i32 = arith.constant 0 : i32
    %c0_i32_0 = arith.constant 0 : i32
    return %arg0, %c0_i32 : i32, i32
  }
}

</mosaic_0001>

<llo_original>
// kernel: tpu_custom_call.1
$region0: #{tpu_custom_call.1}
  #allocation0 [shape = 'u32[]', space=smem, size = 0x4, offset = 0x4, fixed_abs, tag = 'smem constant byte address 0x4 - core index']
  #allocation1 [shape = 'u32[72,128]{1,0:T(1,128)}', space=vmem, size = 0x9000, scoped, tag = 'internal scratch']
  %s0 = inlined_call_operand.vmem [shape: f32[16,32], index: 0, kind: input, shape index: {}]
  %s1 = inlined_call_operand.vmem [shape: f32[32,32], index: 1, kind: input, shape index: {}]
  %s2 = inlined_call_operand.vmem [shape: f32[1,32], index: 2, kind: input, shape index: {}]
  %s3 = inlined_call_operand.hbm [shape: f32[32,32], index: 3, kind: input, shape index: {}]
  %s4 = inlined_call_operand.vmem [shape: f32[1,32], index: 4, kind: input, shape index: {}]
  %s5 = inlined_call_operand.vmem [shape: f32[32,16], index: 5, kind: input, shape index: {}]
  %s6 = inlined_call_operand.vmem [shape: f32[1,16], index: 6, kind: input, shape index: {}]
  %s7 = inlined_call_operand.hbm [shape: f32[16,16], index: 7, kind: output, shape index: {}]
  %s8 = sld [smem:[#allocation0]]
  $region42: #{tpu_custom_call.1} parent=0
    _
  %s10 = ssub.s32 1, %s8
  %s11 = scalar_select 0, %s10, %s8
  $region1: #{tpu_custom_call.1} parent=0
    #allocation2 [shape = 'u8[16384]{0}', space=vmem, size = 0x4000, scoped, tag = 'input window, operand 3, single buffered']
    #allocation3 [shape = 's32[1]{0}', space=sflag, size = 0x4, scoped, tag = 'scoped memory for tpu_custom_call.1']
    #allocation4 [shape = 's32[1]{0}', space=sflag, size = 0x4, scoped, tag = 'scoped memory for tpu_custom_call.1']
    #allocation5 [shape = 'u8[8192]{0}', space=vmem, size = 0x2000, scoped, tag = 'output window, operand 0, single buffered']
    %12 = vsyncpa [#allocation3], 0
    %13 = vsyncpa [#allocation4], 0
    // Predicated region
    $region2: #{tpu_custom_call.1} parent=1 // pred_check
      _
    $region3: #{tpu_custom_call.1} parent=1 // pred_check_branch
      %15 = sbr.rel (0) target = $region5
    $region4: #{tpu_custom_call.1} parent=1 // pred_region
      _
    $region5: #{tpu_custom_call.1} parent=1 // pred_fallthru
      _
    // Predicated region
    $region6: #{tpu_custom_call.1} parent=1 // pred_check
      _
    $region7: #{tpu_custom_call.1} parent=1 // pred_check_branch
      %17 = sbr.rel (0) target = $region9
    $region8: #{tpu_custom_call.1} parent=1 // pred_region
      _
    $region9: #{tpu_custom_call.1} parent=1 // pred_fallthru
      _
    // Predicated region
    $region10: #{tpu_custom_call.1} parent=1 // pred_check
      _
    $region11: #{tpu_custom_call.1} parent=1 // pred_check_branch
      %19 = sbr.rel (0) target = $region13
    $region12: #{tpu_custom_call.1} parent=1 // pred_region
      _
    $region13: #{tpu_custom_call.1} parent=1 // pred_fallthru
      _
    // Predicated region
    $region14: #{tpu_custom_call.1} parent=1 // pred_check
      _
    $region15: #{tpu_custom_call.1} parent=1 // pred_check_branch
      %21 = sbr.rel (0) target = $region17
    $region16: #{tpu_custom_call.1} parent=1 // pred_region
      %23 = vsyncadd [#allocation3], 0
      %s24 = sshll.u32 %s3, 4
      %s25 = int_to_ptr.hbm [resolvable:$true] %s24
      %s26 = sshll.u32 [#allocation2], 4
      %s27 = int_to_ptr.vmem [resolvable:$true] %s26
      %32 = dma.hbm_to_vmem [thread:$0]  %s25, 512, %s27, [#allocation3], 128, 128, 8
    $region17: #{tpu_custom_call.1} parent=1 // pred_fallthru
      _
    // Predicated region
    $region18: #{tpu_custom_call.1} parent=1 // pred_check
      _
    $region19: #{tpu_custom_call.1} parent=1 // pred_check_branch
      %34 = sbr.rel (0) target = $region21
    $region20: #{tpu_custom_call.1} parent=1 // pred_region
      _
    $region21: #{tpu_custom_call.1} parent=1 // pred_fallthru
      _
    // Predicated region
    $region22: #{tpu_custom_call.1} parent=1 // pred_check
      _
    $region23: #{tpu_custom_call.1} parent=1 // pred_check_branch
      %36 = sbr.rel (0) target = $region25
    $region24: #{tpu_custom_call.1} parent=1 // pred_region
      _
    $region25: #{tpu_custom_call.1} parent=1 // pred_fallthru
      _
    // Predicated region
    $region26: #{tpu_custom_call.1} parent=1 // pred_check
      _
    $region27: #{tpu_custom_call.1} parent=1 // pred_check_branch
      %38 = sbr.rel (0) target = $region29
    $region28: #{tpu_custom_call.1} parent=1 // pred_region
      _
    $region29: #{tpu_custom_call.1} parent=1 // pred_fallthru
      _
    // Predicated region
    $region30: #{tpu_custom_call.1} parent=1 // pred_check
      _
    $region31: #{tpu_custom_call.1} parent=1 // pred_check_branch
      %40 = sbr.rel (0) target = $region33
    $region32: #{tpu_custom_call.1} parent=1 // pred_region
      %42 = dma.done [#allocation3], 512
    $region33: #{tpu_custom_call.1} parent=1 // pred_fallthru
      _
    %v43 = vld [vmem:[%s0] sm:$0xff]
    %v44 = vld [vmem:[%s0 + $0x8] sm:$0xff]
    %v45 = vld [vmem:[%s1] sm:$0xff]
    %v46 = vld [vmem:[%s1 + $0x8] sm:$0xff]
    %v47 = vld [vmem:[%s1 + $0x10] sm:$0xff]
    %v48 = vld [vmem:[%s1 + $0x18] sm:$0xff]
    %v49 = vld [vmem:[%s2] sm:$0x1]
    %v51 = vperm.slane %v49, 0
    %vm53 = vcmask 261120
    %v55 = vsel %vm53, %v43, 0
    %v58 = vsel %vm53, %v44, 0
    %60 = vmatpush.msra.mxu0 0.0
    %61 = vmatpush.msra.mxu0 0.0
    %62 = vmatpush.msra.mxu0 0.0
    %63 = vmatpush.msra.mxu0 0.0
    %64 = vmatpush.msra.mxu0 0.0
    %65 = vmatpush.msra.mxu0 0.0
    %66 = vmatpush.msra.mxu0 0.0
    %67 = vmatpush.msra.mxu0 0.0
    %68 = vmatpush.msra.mxu0 0.0
    %69 = vmatpush.msra.mxu0 0.0
    %70 = vmatpush.msra.mxu0 0.0
    %71 = vmatpush.msra.mxu0 0.0
    %72 = vmatpush.msra.mxu0 %v48
    %73 = vmatpush.msra.mxu0 %v47
    %74 = vmatpush.msra.mxu0 %v46
    %75 = vmatpush.msra.mxu0 %v45
    %76 = vmatmul.f32.gmra.mxu0 %v55
    %v77 = vpop.f32.mrf.mxu0
    %v78 = vadd.f32 %v51, %v77
    %79 = vmatmul.f32.gmra.mxu0 %v58
    %v80 = vpop.f32.mrf.mxu0
    %v81 = vadd.f32 %v51, %v80
    %82 = vdwg.mxu0
    %v83 = vmax.f32 %v78, 0.0
    %v84 = vmax.f32 %v81, 0.0
    %v85 = vld [vmem:[#allocation2] sm:$0xff]
    %v86 = vld [vmem:[#allocation2 + $0x8] sm:$0xff]
    %v87 = vld [vmem:[#allocation2 + $0x10] sm:$0xff]
    %v88 = vld [vmem:[#allocation2 + $0x18] sm:$0xff]
    %v89 = vld [vmem:[%s4] sm:$0x1]
    %v91 = vperm.slane %v89, 0
    %v94 = vsel %vm53, %v83, 0
    %v97 = vsel %vm53, %v84, 0
    %99 = vmatpush.msra.mxu0 0.0
    %100 = vmatpush.msra.mxu0 0.0
    %101 = vmatpush.msra.mxu0 0.0
    %102 = vmatpush.msra.mxu0 0.0
    %103 = vmatpush.msra.mxu0 0.0
    %104 = vmatpush.msra.mxu0 0.0
    %105 = vmatpush.msra.mxu0 0.0
    %106 = vmatpush.msra.mxu0 0.0
    %107 = vmatpush.msra.mxu0 0.0
    %108 = vmatpush.msra.mxu0 0.0
    %109 = vmatpush.msra.mxu0 0.0
    %110 = vmatpush.msra.mxu0 0.0
    %111 = vmatpush.msra.mxu0 %v88
    %112 = vmatpush.msra.mxu0 %v87
    %113 = vmatpush.msra.mxu0 %v86
    %114 = vmatpush.msra.mxu0 %v85
    %115 = vmatmul.f32.gmra.mxu0 %v94
    %v116 = vpop.f32.mrf.mxu0
    %v117 = vadd.f32 %v91, %v116
    %118 = vmatmul.f32.gmra.mxu0 %v97
    %v119 = vpop.f32.mrf.mxu0
    %v120 = vadd.f32 %v91, %v119
    %121 = vdwg.mxu0
    %v122 = vmax.f32 %v117, 0.0
    %v123 = vmax.f32 %v120, 0.0
    %v124 = vld [vmem:[%s5] sm:$0xff]
    %v125 = vld [vmem:[%s5 + $0x8] sm:$0xff]
    %v126 = vld [vmem:[%s5 + $0x10] sm:$0xff]
    %v127 = vld [vmem:[%s5 + $0x18] sm:$0xff]
    %v128 = vld [vmem:[%s6] sm:$0x1]
    %v130 = vperm.slane %v128, 0
    %v133 = vsel %vm53, %v122, 0
    %v136 = vsel %vm53, %v123, 0
    %138 = vmatpush.msra.mxu0 0.0
    %139 = vmatpush.msra.mxu0 0.0
    %140 = vmatpush.msra.mxu0 0.0
    %141 = vmatpush.msra.mxu0 0.0
    %142 = vmatpush.msra.mxu0 0.0
    %143 = vmatpush.msra.mxu0 0.0
    %144 = vmatpush.msra.mxu0 0.0
    %145 = vmatpush.msra.mxu0 0.0
    %146 = vmatpush.msra.mxu0 0.0
    %147 = vmatpush.msra.mxu0 0.0
    %148 = vmatpush.msra.mxu0 0.0
    %149 = vmatpush.msra.mxu0 0.0
    %150 = vmatpush.msra.mxu0 %v127
    %151 = vmatpush.msra.mxu0 %v126
    %152 = vmatpush.msra.mxu0 %v125
    %153 = vmatpush.msra.mxu0 %v124
    %154 = vmatmul.f32.gmra.mxu0 %v133
    %v155 = vpop.f32.mrf.mxu0
    %v156 = vadd.f32 %v130, %v155
    %157 = vmatmul.f32.gmra.mxu0 %v136
    %v158 = vpop.f32.mrf.mxu0
    %v159 = vadd.f32 %v130, %v158
    %160 = vdwg.mxu0
    %vm161 = vcmask 130048
    %162 = vst.msk [vmem:[#allocation5] sm:$0xff] %vm161, %v156
    %163 = vst.msk [vmem:[#allocation5 + $0x8] sm:$0xff] %vm161, %v159
    // Predicated region
    $region34: #{tpu_custom_call.1} parent=1 // pred_check
      _
    $region35: #{tpu_custom_call.1} parent=1 // pred_check_branch
      %165 = sbr.rel (0) target = $region37
    $region36: #{tpu_custom_call.1} parent=1 // pred_region
      %167 = vsyncadd [#allocation4], 0
      %s168 = sshll.u32 [#allocation5], 4
      %s169 = int_to_ptr.vmem [resolvable:$true] %s168
      %s170 = sshll.u32 %s7, 4
      %s171 = int_to_ptr.hbm [resolvable:$true] %s170
      %176 = dma.vmem_to_hbm [thread:$0]  %s169, 256, %s171, [#allocation4], 128, 128, 8
    $region37: #{tpu_custom_call.1} parent=1 // pred_fallthru
      _
    // Predicated region
    $region38: #{tpu_custom_call.1} parent=1 // pred_check
      _
    $region39: #{tpu_custom_call.1} parent=1 // pred_check_branch
      %178 = sbr.rel (0) target = $region41
    $region40: #{tpu_custom_call.1} parent=1 // pred_region
      %180 = dma.done [#allocation4], 256
    $region41: #{tpu_custom_call.1} parent=1 // pred_fallthru
      _
    %181 = vsyncpa [#allocation3], 1
    %182 = vsyncpa [#allocation4], 1

</llo_original>
